<compile_context>
chip_gen: v6e
topology: v6e:2x2x1
jax: 0.10.0
libtpu: 0.0.40
codegen_flags: <defaults>
</compile_context>

<pallas_src>
import functools
import math

import jax
import jax.numpy as jnp
from jax import lax
from jax.experimental import pallas as pl
from jax.experimental.pallas import tpu as pltpu


# ----------------------------------------------------------------------------
# Fused kernel: one grid step == `batch_block` batch elements.
#   h      = relu(x @ W1 + b1)                       (fc1 + ReLU)
#   qk_sh  = h @ W_fold + [T_D|D_W] @ W_tdw          (BN/fc2/WQK_dy folded)
#   adj_d  = softmax((qk_sh + qk_d)_Q (qk_sh + qk_d)_K^T)   (1/sqrt(H) folded)
#   adj_u  = softmax((qk_sh + qk_u)_Q (qk_sh + qk_u)_K^T)
# ----------------------------------------------------------------------------
def fused_kernel(x_ref, tdw_ref, qkd_ref, qku_ref,
                 w1_ref, b1_ref, wfold_ref, wtdw_ref,
                 out_ref, *, hidden_dim, num_nodes, batch_block):
    f32 = jnp.float32
    bf16 = jnp.bfloat16
    H = hidden_dim
    N = num_nodes

    # ---- fc1 + ReLU (dropout is identity in eval mode) ----------------------
    h = jnp.dot(x_ref[...].astype(bf16), w1_ref[...],
                preferred_element_type=f32) + b1_ref[...]          # [bb*N, 2H]
    h = jnp.maximum(h, 0.0)

    # ---- shared Q|K projection (BN + fc2 + WQK_dy folded into wfold) --------
    qk_sh = jnp.dot(h.astype(bf16), wfold_ref[...],
                    preferred_element_type=f32)                    # [bb*N, 2H]
    qk_sh += jnp.dot(tdw_ref[...].astype(bf16), wtdw_ref[...],
                     preferred_element_type=f32)

    qk_d = qkd_ref[...]   # [N, 2H] f32 (E_d @ WQK_emb + folded bias)
    qk_u = qku_ref[...]   # [N, 2H] f32 (E_u @ WQK_emb + folded bias)

    def attn(qk):
        q = qk[:, :H].astype(bf16)                                 # [N, H]
        k = qk[:, H:].astype(bf16)                                 # [N, H]
        # Contract on H directly (no explicit transpose). 1/sqrt(H) already
        # folded into the Q-half weights.
        s = lax.dot_general(q, k, (((1,), (1,)), ((), ())),
                            preferred_element_type=f32)            # [N, N]
        s = s - jnp.max(s, axis=-1, keepdims=True)
        e = jnp.exp(s)
        return e / jnp.sum(e, axis=-1, keepdims=True)              # exact norm

    for b in range(batch_block):                 # static, fully unrolled
        qk_b = qk_sh[b * N:(b + 1) * N]          # sublane-aligned static slice
        p1 = attn(qk_b + qk_d)                   # [N, N]
        p2 = attn(qk_b + qk_u)                   # [N, N]
        out_ref[b] = jnp.concatenate([p1, p2], axis=-1)   # lane-dense [N, 2N]


def _default_batch_block(batch):
    """bb=1 (parallel batch grid) on 2-TC v7x, otherwise collapse the batch."""
    try:
        kind = jax.devices()[0].device_kind.lower()
    except Exception:
        kind = ""
    if batch > 1 and "v7" in kind:
        return 1          # grid=(B,) "parallel" -> feed both TensorCores
    return batch          # grid=(1,) -> single step on 1-TC chips / interpret


# ----------------------------------------------------------------------------
# Forward wrapper: trace-time weight folding + one fused Pallas call.
# ----------------------------------------------------------------------------
def distance_function_forward(params, X, E_d, E_u, T_D, D_W, *, hidden_dim,
                              batch_block=None):
    # Slice last time step of the temporal embeddings.
    T_D = T_D[:, -1, :, :]                       # [B, N, Dt]
    D_W = D_W[:, -1, :, :]                       # [B, N, Dt]

    # X: [B, L, N, C] -> channel 0, transpose -> [B, N, L]
    Xs = jnp.transpose(X[:, :, :, 0], (0, 2, 1))
    B, N, L = Xs.shape
    Dt = T_D.shape[-1]
    H = hidden_dim
    H2 = 2 * H
    bf16 = jnp.bfloat16

    bb = _default_batch_block(B) if batch_block is None else batch_block
    assert B % bb == 0

    # Fused [WQ|WK] weight with 1/sqrt(H) folded into the WQ half, split along
    # the feature rows that correspond to [dy_feat | T_D | D_W | emb].
    inv_sqrt_h = 1.0 / math.sqrt(H)
    wqk = jnp.concatenate([params["wq"] * inv_sqrt_h, params["wk"]], axis=1)
    wqk_dy = wqk[:H]                                               # [H,  2H]
    wqk_td = wqk[H:H + Dt]                                         # [Dt, 2H]
    wqk_dw = wqk[H + Dt:H + 2 * Dt]                                # [Dt, 2H]
    wqk_emb = wqk[H + 2 * Dt:]                                     # [nd, 2H]

    # Exact fold of BatchNorm(eval) + fc2 + WQK_dy (f32, single bf16 cast):
    #   qk_dy = relu_h @ W_fold + b_fold
    w_fold = (params["bn_scale"].reshape(H2, 1) * params["w2"]) @ wqk_dy
    b_fold = (params["bn_shift"] @ params["w2"] + params["b2"]) @ wqk_dy

    # Hoist batch-invariant embedding projections (f32); absorb b_fold.
    qk_d = E_d @ wqk_emb + b_fold                                  # [N, 2H]
    qk_u = E_u @ wqk_emb + b_fold                                  # [N, 2H]

    # Merge T_D|D_W into one activation / one weight.
    tdw = jnp.concatenate([T_D, D_W], axis=-1).reshape(B * N, 2 * Dt)
    w_tdw = jnp.concatenate([wqk_td, wqk_dw], axis=0)              # [2Dt, 2H]

    x_flat = Xs.reshape(B * N, L)

    w1 = params["w1"].astype(bf16)
    w_fold = w_fold.astype(bf16)
    w_tdw = w_tdw.astype(bf16)

    kernel = functools.partial(fused_kernel, hidden_dim=H, num_nodes=N,
                               batch_block=bb)
    rows = lambda i: (i, 0)
    const2 = lambda i: (0, 0)

    out = pl.pallas_call(
        kernel,
        out_shape=jax.ShapeDtypeStruct((B, N, 2 * N), jnp.float32),
        grid=(B // bb,),
        in_specs=[
            pl.BlockSpec((bb * N, L), rows),          # x rows (per step)
            pl.BlockSpec((bb * N, 2 * Dt), rows),     # [T_D|D_W] rows
            pl.BlockSpec((N, H2), const2),            # qk_d (+bias, resident)
            pl.BlockSpec((N, H2), const2),            # qk_u (+bias, resident)
            pl.BlockSpec((L, H2), const2),            # w1   (bf16, resident)
            pl.BlockSpec((1, H2), const2),            # b1
            pl.BlockSpec((H2, H2), const2),           # W_fold (bf16)
            pl.BlockSpec((2 * Dt, H2), const2),       # W_tdw  (bf16)
        ],
        out_specs=pl.BlockSpec((bb, N, 2 * N), lambda i: (i, 0, 0)),
        compiler_params=pltpu.CompilerParams(
            dimension_semantics=("parallel",)),
    )(x_flat, tdw, qk_d, qk_u, w1, params["b1"], w_fold, w_tdw)

    # Split the lane-dense slab into the two adjacency matrices.
    return [out[..., :N], out[..., N:]]


# ----------------------------------------------------------------------------
# Pure-JAX f32 reference (correctness checking only).
# ----------------------------------------------------------------------------
def reference_forward(params, X, E_d, E_u, T_D, D_W, *, hidden_dim):
    T_D = T_D[:, -1]
    D_W = D_W[:, -1]
    Xs = jnp.transpose(X[:, :, :, 0], (0, 2, 1))
    B, N, L = Xs.shape
    x = Xs.reshape(B * N, L)
    h = jnp.maximum(x @ params["w1"] + params["b1"], 0.0)
    h = h * params["bn_scale"] + params["bn_shift"]
    dy = (h @ params["w2"] + params["b2"]).reshape(B, N, -1)
    e1 = jnp.broadcast_to(E_d[None], (B,) + E_d.shape)
    e2 = jnp.broadcast_to(E_u[None], (B,) + E_u.shape)
    outs = []
    for emb in (e1, e2):
        Xc = jnp.concatenate([dy, T_D, D_W, emb], axis=-1)
        Q = Xc @ params["wq"]
        K = Xc @ params["wk"]
        S = jnp.einsum("bnh,bmh->bnm", Q, K) / math.sqrt(hidden_dim)
        outs.append(jax.nn.softmax(S, axis=-1))
    return outs


def init_params(key, *, seq_len, hidden_dim, all_feat_dim):
    ks = jax.random.split(key, 6)
    H2 = hidden_dim * 2
    # nn.Linear weights stored already transposed for right-multiplication.
    w1 = 0.1 * jax.random.normal(ks[0], (seq_len, H2), jnp.float32)
    b1 = 0.1 * jax.random.normal(ks[1], (1, H2), jnp.float32)
    w2 = 0.1 * jax.random.normal(ks[2], (H2, hidden_dim), jnp.float32)
    b2 = 0.1 * jax.random.normal(ks[3], (1, hidden_dim), jnp.float32)
    wq = 0.1 * jax.random.normal(ks[4], (all_feat_dim, hidden_dim), jnp.float32)
    wk = 0.1 * jax.random.normal(ks[5], (all_feat_dim, hidden_dim), jnp.float32)
    # BatchNorm1d (eval): gamma=1, beta=0, running_mean=0, running_var=1.
    eps = 1e-5
    gamma = jnp.ones((1, H2), jnp.float32)
    beta = jnp.zeros((1, H2), jnp.float32)
    running_mean = jnp.zeros((1, H2), jnp.float32)
    running_var = jnp.ones((1, H2), jnp.float32)
    bn_scale = gamma / jnp.sqrt(running_var + eps)
    bn_shift = beta - running_mean * bn_scale
    # NOTE: self.time_slot_embedding is unused in the reference forward().
    return dict(w1=w1, b1=b1, w2=w2, b2=b2, wq=wq, wk=wk,
                bn_scale=bn_scale, bn_shift=bn_shift)


if __name__ == "__main__":
    # model_args
    num_hidden = 32          # hidden_dim
    node_hidden = 16         # node_dim
    time_emb_dim = 8
    input_seq_len = 12
    all_feat_dim = num_hidden + node_hidden + 2 * time_emb_dim  # 64

    # small shapes
    batch = 2
    num_nodes = 16

    key = jax.random.PRNGKey(0)
    kx, ktd, kdw, ked, keu, kp = jax.random.split(key, 6)

    X = jax.random.normal(kx, (batch, input_seq_len, num_nodes, 1), jnp.float32)
    T_D = jax.random.normal(ktd, (batch, input_seq_len, num_nodes, time_emb_dim),
                            jnp.float32)
    D_W = jax.random.normal(kdw, (batch, input_seq_len, num_nodes, time_emb_dim),
                            jnp.float32)
    E_d = jax.random.normal(ked, (num_nodes, node_hidden), jnp.float32)
    E_u = jax.random.normal(keu, (num_nodes, node_hidden), jnp.float32)

    params = init_params(kp, seq_len=input_seq_len, hidden_dim=num_hidden,
                         all_feat_dim=all_feat_dim)

    fwd = jax.jit(functools.partial(distance_function_forward,
                                    hidden_dim=num_hidden))
    adj_list = jax.block_until_ready(fwd(params, X, E_d, E_u, T_D, D_W))

    assert adj_list[0].shape == (batch, num_nodes, num_nodes)
    assert adj_list[1].shape == (batch, num_nodes, num_nodes)
    # Softmax rows must sum to 1 (exact division in the kernel).
    assert bool(jnp.allclose(jnp.sum(adj_list[0], axis=-1), 1.0, atol=1e-3))
    assert bool(jnp.allclose(jnp.sum(adj_list[1], axis=-1), 1.0, atol=1e-3))

    # Compare against f32 reference (loose tol: bf16 MXU operands).
    ref = reference_forward(params, X, E_d, E_u, T_D, D_W,
                            hidden_dim=num_hidden)
    assert bool(jnp.allclose(adj_list[0], ref[0], atol=2e-2))
    assert bool(jnp.allclose(adj_list[1], ref[1], atol=2e-2))

    print("KERNEL_OK")
</pallas_src>

<mosaic_0001>
module attributes {stable_mosaic.version = 11 : i64} {
  func.func @fused_kernel(%arg0: i32, %arg1: memref<32x12xf32, #tpu.memory_space<vmem>>, %arg2: memref<32x16xf32, #tpu.memory_space<vmem>>, %arg3: memref<16x64xf32, #tpu.memory_space<vmem>>, %arg4: memref<16x64xf32, #tpu.memory_space<vmem>>, %arg5: memref<12x64xbf16, #tpu.memory_space<vmem>>, %arg6: memref<1x64xf32, #tpu.memory_space<vmem>>, %arg7: memref<64x64xbf16, #tpu.memory_space<vmem>>, %arg8: memref<16x64xbf16, #tpu.memory_space<vmem>>, %arg9: memref<2x16x32xf32, #tpu.memory_space<vmem>>) attributes {dimension_semantics = [#tpu.dimension_semantics<parallel>], iteration_bounds = array<i64: 1>, scalar_prefetch = 0 : i64, scratch_operands = 0 : i64, tpu.core_type = #tpu.core_type<tc>, window_params = [{transform_indices = @transform_0, window_bounds = array<i64: 32, 12>}, {transform_indices = @transform_1, window_bounds = array<i64: 32, 16>}, {pipeline_mode = #tpu.pipeline_mode<synchronous>, transform_indices = @transform_2, window_bounds = array<i64: 16, 64>}, {pipeline_mode = #tpu.pipeline_mode<synchronous>, transform_indices = @transform_3, window_bounds = array<i64: 16, 64>}, {pipeline_mode = #tpu.pipeline_mode<synchronous>, transform_indices = @transform_4, window_bounds = array<i64: 12, 64>}, {pipeline_mode = #tpu.pipeline_mode<synchronous>, transform_indices = @transform_5, window_bounds = array<i64: 1, 64>}, {pipeline_mode = #tpu.pipeline_mode<synchronous>, transform_indices = @transform_6, window_bounds = array<i64: 64, 64>}, {pipeline_mode = #tpu.pipeline_mode<synchronous>, transform_indices = @transform_7, window_bounds = array<i64: 16, 64>}, {transform_indices = @transform_8, window_bounds = array<i64: 2, 16, 32>}]} {
    %c0 = arith.constant 0 : index
    %c0_0 = arith.constant 0 : index
    %0 = vector.load %arg1[%c0, %c0_0] : memref<32x12xf32, #tpu.memory_space<vmem>>, vector<32x12xf32>
    %1 = arith.truncf %0 : vector<32x12xf32> to vector<32x12xbf16>
    %c0_1 = arith.constant 0 : index
    %c0_2 = arith.constant 0 : index
    %2 = vector.load %arg5[%c0_1, %c0_2] : memref<12x64xbf16, #tpu.memory_space<vmem>>, vector<12x64xbf16>
    %cst = arith.constant dense<0.000000e+00> : vector<32x64xf32>
    %3 = tpu.matmul %1, %2, %cst {dimension_numbers = #tpu.dot_dimension_numbers<[1], [0], [0], [1], [0, 0, 1, 1], [], []>} : vector<32x12xbf16>, vector<12x64xbf16>, vector<32x64xf32> -> vector<32x64xf32>
    %c0_3 = arith.constant 0 : index
    %c0_4 = arith.constant 0 : index
    %4 = vector.load %arg6[%c0_3, %c0_4] : memref<1x64xf32, #tpu.memory_space<vmem>>, vector<1x64xf32>
    %5 = vector.broadcast %4 : vector<1x64xf32> to vector<32x64xf32>
    %6 = arith.addf %3, %5 : vector<32x64xf32>
    %cst_5 = arith.constant 0.000000e+00 : f32
    %7 = vector.broadcast %cst_5 : f32 to vector<32x64xf32>
    %8 = arith.maximumf %6, %7 : vector<32x64xf32>
    %9 = arith.truncf %8 : vector<32x64xf32> to vector<32x64xbf16>
    %c0_6 = arith.constant 0 : index
    %c0_7 = arith.constant 0 : index
    %10 = vector.load %arg7[%c0_6, %c0_7] : memref<64x64xbf16, #tpu.memory_space<vmem>>, vector<64x64xbf16>
    %cst_8 = arith.constant dense<0.000000e+00> : vector<32x64xf32>
    %11 = tpu.matmul %9, %10, %cst_8 {dimension_numbers = #tpu.dot_dimension_numbers<[1], [0], [0], [1], [0, 0, 1, 1], [], []>} : vector<32x64xbf16>, vector<64x64xbf16>, vector<32x64xf32> -> vector<32x64xf32>
    %c0_9 = arith.constant 0 : index
    %c0_10 = arith.constant 0 : index
    %12 = vector.load %arg2[%c0_9, %c0_10] : memref<32x16xf32, #tpu.memory_space<vmem>>, vector<32x16xf32>
    %13 = arith.truncf %12 : vector<32x16xf32> to vector<32x16xbf16>
    %c0_11 = arith.constant 0 : index
    %c0_12 = arith.constant 0 : index
    %14 = vector.load %arg8[%c0_11, %c0_12] : memref<16x64xbf16, #tpu.memory_space<vmem>>, vector<16x64xbf16>
    %cst_13 = arith.constant dense<0.000000e+00> : vector<32x64xf32>
    %15 = tpu.matmul %13, %14, %cst_13 {dimension_numbers = #tpu.dot_dimension_numbers<[1], [0], [0], [1], [0, 0, 1, 1], [], []>} : vector<32x16xbf16>, vector<16x64xbf16>, vector<32x64xf32> -> vector<32x64xf32>
    %16 = arith.addf %11, %15 : vector<32x64xf32>
    %c0_14 = arith.constant 0 : index
    %c0_15 = arith.constant 0 : index
    %17 = vector.load %arg3[%c0_14, %c0_15] : memref<16x64xf32, #tpu.memory_space<vmem>>, vector<16x64xf32>
    %c0_16 = arith.constant 0 : index
    %c0_17 = arith.constant 0 : index
    %18 = vector.load %arg4[%c0_16, %c0_17] : memref<16x64xf32, #tpu.memory_space<vmem>>, vector<16x64xf32>
    %19 = vector.extract_strided_slice %16 {offsets = [0, 0], sizes = [16, 64], strides = [1, 1]} : vector<32x64xf32> to vector<16x64xf32>
    %20 = arith.addf %19, %17 : vector<16x64xf32>
    %21 = vector.extract_strided_slice %20 {offsets = [0, 0], sizes = [16, 32], strides = [1, 1]} : vector<16x64xf32> to vector<16x32xf32>
    %22 = arith.truncf %21 : vector<16x32xf32> to vector<16x32xbf16>
    %23 = vector.extract_strided_slice %20 {offsets = [0, 32], sizes = [16, 32], strides = [1, 1]} : vector<16x64xf32> to vector<16x32xf32>
    %24 = arith.truncf %23 : vector<16x32xf32> to vector<16x32xbf16>
    %cst_18 = arith.constant dense<0.000000e+00> : vector<16x16xf32>
    %25 = tpu.matmul %22, %24, %cst_18 {dimension_numbers = #tpu.dot_dimension_numbers<[1], [1], [0], [0], [0, 0, 1, 0], [], []>} : vector<16x32xbf16>, vector<16x32xbf16>, vector<16x16xf32> -> vector<16x16xf32>
    %cst_19 = arith.constant dense<0xFF800000> : vector<16xf32>
    %26 = vector.multi_reduction <maximumf>, %25, %cst_19 [1] : vector<16x16xf32> to vector<16xf32>
    %27 = vector.shape_cast %26 : vector<16xf32> to vector<16x1xf32>
    %28 = vector.broadcast %27 : vector<16x1xf32> to vector<16x16xf32>
    %29 = arith.subf %25, %28 : vector<16x16xf32>
    %30 = math.exp %29 : vector<16x16xf32>
    %cst_20 = arith.constant dense<0.000000e+00> : vector<16xf32>
    %31 = vector.multi_reduction <add>, %30, %cst_20 [1] : vector<16x16xf32> to vector<16xf32>
    %32 = vector.shape_cast %31 : vector<16xf32> to vector<16x1xf32>
    %33 = vector.broadcast %32 : vector<16x1xf32> to vector<16x16xf32>
    %34 = arith.divf %30, %33 : vector<16x16xf32>
    %35 = arith.addf %19, %18 : vector<16x64xf32>
    %36 = vector.extract_strided_slice %35 {offsets = [0, 0], sizes = [16, 32], strides = [1, 1]} : vector<16x64xf32> to vector<16x32xf32>
    %37 = arith.truncf %36 : vector<16x32xf32> to vector<16x32xbf16>
    %38 = vector.extract_strided_slice %35 {offsets = [0, 32], sizes = [16, 32], strides = [1, 1]} : vector<16x64xf32> to vector<16x32xf32>
    %39 = arith.truncf %38 : vector<16x32xf32> to vector<16x32xbf16>
    %cst_21 = arith.constant dense<0.000000e+00> : vector<16x16xf32>
    %40 = tpu.matmul %37, %39, %cst_21 {dimension_numbers = #tpu.dot_dimension_numbers<[1], [1], [0], [0], [0, 0, 1, 0], [], []>} : vector<16x32xbf16>, vector<16x32xbf16>, vector<16x16xf32> -> vector<16x16xf32>
    %cst_22 = arith.constant dense<0xFF800000> : vector<16xf32>
    %41 = vector.multi_reduction <maximumf>, %40, %cst_22 [1] : vector<16x16xf32> to vector<16xf32>
    %42 = vector.shape_cast %41 : vector<16xf32> to vector<16x1xf32>
    %43 = vector.broadcast %42 : vector<16x1xf32> to vector<16x16xf32>
    %44 = arith.subf %40, %43 : vector<16x16xf32>
    %45 = math.exp %44 : vector<16x16xf32>
    %cst_23 = arith.constant dense<0.000000e+00> : vector<16xf32>
    %46 = vector.multi_reduction <add>, %45, %cst_23 [1] : vector<16x16xf32> to vector<16xf32>
    %47 = vector.shape_cast %46 : vector<16xf32> to vector<16x1xf32>
    %48 = vector.broadcast %47 : vector<16x1xf32> to vector<16x16xf32>
    %49 = arith.divf %45, %48 : vector<16x16xf32>
    %50 = tpu.concatenate %34, %49 in 1 : vector<16x16xf32>, vector<16x16xf32> -> vector<16x32xf32>
    %c0_24 = arith.constant 0 : index
    %c0_25 = arith.constant 0 : index
    %c0_26 = arith.constant 0 : index
    %51 = vector.load %arg9[%c0_24, %c0_25, %c0_26] : memref<2x16x32xf32, #tpu.memory_space<vmem>>, vector<1x16x32xf32>
    %52 = vector.shape_cast %51 : vector<1x16x32xf32> to vector<16x32xf32>
    %53 = vector.shape_cast %50 : vector<16x32xf32> to vector<1x16x32xf32>
    tpu.vector_store %arg9[%c0_24, %c0_25, %c0_26], %53 {strides = array<i32>} : memref<2x16x32xf32, #tpu.memory_space<vmem>>, vector<1x16x32xf32>,
    %54 = vector.extract_strided_slice %16 {offsets = [16, 0], sizes = [16, 64], strides = [1, 1]} : vector<32x64xf32> to vector<16x64xf32>
    %55 = arith.addf %54, %17 : vector<16x64xf32>
    %56 = vector.extract_strided_slice %55 {offsets = [0, 0], sizes = [16, 32], strides = [1, 1]} : vector<16x64xf32> to vector<16x32xf32>
    %57 = arith.truncf %56 : vector<16x32xf32> to vector<16x32xbf16>
    %58 = vector.extract_strided_slice %55 {offsets = [0, 32], sizes = [16, 32], strides = [1, 1]} : vector<16x64xf32> to vector<16x32xf32>
    %59 = arith.truncf %58 : vector<16x32xf32> to vector<16x32xbf16>
    %cst_27 = arith.constant dense<0.000000e+00> : vector<16x16xf32>
    %60 = tpu.matmul %57, %59, %cst_27 {dimension_numbers = #tpu.dot_dimension_numbers<[1], [1], [0], [0], [0, 0, 1, 0], [], []>} : vector<16x32xbf16>, vector<16x32xbf16>, vector<16x16xf32> -> vector<16x16xf32>
    %cst_28 = arith.constant dense<0xFF800000> : vector<16xf32>
    %61 = vector.multi_reduction <maximumf>, %60, %cst_28 [1] : vector<16x16xf32> to vector<16xf32>
    %62 = vector.shape_cast %61 : vector<16xf32> to vector<16x1xf32>
    %63 = vector.broadcast %62 : vector<16x1xf32> to vector<16x16xf32>
    %64 = arith.subf %60, %63 : vector<16x16xf32>
    %65 = math.exp %64 : vector<16x16xf32>
    %cst_29 = arith.constant dense<0.000000e+00> : vector<16xf32>
    %66 = vector.multi_reduction <add>, %65, %cst_29 [1] : vector<16x16xf32> to vector<16xf32>
    %67 = vector.shape_cast %66 : vector<16xf32> to vector<16x1xf32>
    %68 = vector.broadcast %67 : vector<16x1xf32> to vector<16x16xf32>
    %69 = arith.divf %65, %68 : vector<16x16xf32>
    %70 = arith.addf %54, %18 : vector<16x64xf32>
    %71 = vector.extract_strided_slice %70 {offsets = [0, 0], sizes = [16, 32], strides = [1, 1]} : vector<16x64xf32> to vector<16x32xf32>
    %72 = arith.truncf %71 : vector<16x32xf32> to vector<16x32xbf16>
    %73 = vector.extract_strided_slice %70 {offsets = [0, 32], sizes = [16, 32], strides = [1, 1]} : vector<16x64xf32> to vector<16x32xf32>
    %74 = arith.truncf %73 : vector<16x32xf32> to vector<16x32xbf16>
    %cst_30 = arith.constant dense<0.000000e+00> : vector<16x16xf32>
    %75 = tpu.matmul %72, %74, %cst_30 {dimension_numbers = #tpu.dot_dimension_numbers<[1], [1], [0], [0], [0, 0, 1, 0], [], []>} : vector<16x32xbf16>, vector<16x32xbf16>, vector<16x16xf32> -> vector<16x16xf32>
    %cst_31 = arith.constant dense<0xFF800000> : vector<16xf32>
    %76 = vector.multi_reduction <maximumf>, %75, %cst_31 [1] : vector<16x16xf32> to vector<16xf32>
    %77 = vector.shape_cast %76 : vector<16xf32> to vector<16x1xf32>
    %78 = vector.broadcast %77 : vector<16x1xf32> to vector<16x16xf32>
    %79 = arith.subf %75, %78 : vector<16x16xf32>
    %80 = math.exp %79 : vector<16x16xf32>
    %cst_32 = arith.constant dense<0.000000e+00> : vector<16xf32>
    %81 = vector.multi_reduction <add>, %80, %cst_32 [1] : vector<16x16xf32> to vector<16xf32>
    %82 = vector.shape_cast %81 : vector<16xf32> to vector<16x1xf32>
    %83 = vector.broadcast %82 : vector<16x1xf32> to vector<16x16xf32>
    %84 = arith.divf %80, %83 : vector<16x16xf32>
    %85 = tpu.concatenate %69, %84 in 1 : vector<16x16xf32>, vector<16x16xf32> -> vector<16x32xf32>
    %c1 = arith.constant 1 : index
    %c0_33 = arith.constant 0 : index
    %c0_34 = arith.constant 0 : index
    %86 = vector.load %arg9[%c1, %c0_33, %c0_34] : memref<2x16x32xf32, #tpu.memory_space<vmem>>, vector<1x16x32xf32>
    %87 = vector.shape_cast %86 : vector<1x16x32xf32> to vector<16x32xf32>
    %88 = vector.shape_cast %85 : vector<16x32xf32> to vector<1x16x32xf32>
    tpu.vector_store %arg9[%c1, %c0_33, %c0_34], %88 {strides = array<i32>} : memref<2x16x32xf32, #tpu.memory_space<vmem>>, vector<1x16x32xf32>,
    return
  }
  func.func @transform_0(%arg0: i32) -> (i32, i32) {
    %c0_i32 = arith.constant 0 : i32
    %c0_i32_0 = arith.constant 0 : i32
    return %arg0, %c0_i32 : i32, i32
  }
  func.func @transform_1(%arg0: i32) -> (i32, i32) {
    %c0_i32 = arith.constant 0 : i32
    %c0_i32_0 = arith.constant 0 : i32
    return %arg0, %c0_i32 : i32, i32
  }
  func.func @transform_2(%arg0: i32) -> (i32, i32) {
    %c0_i32 = arith.constant 0 : i32
    %c0_i32_0 = arith.constant 0 : i32
    %c0_i32_1 = arith.constant 0 : i32
    return %c0_i32, %c0_i32_0 : i32, i32
  }
  func.func @transform_3(%arg0: i32) -> (i32, i32) {
    %c0_i32 = arith.constant 0 : i32
    %c0_i32_0 = arith.constant 0 : i32
    %c0_i32_1 = arith.constant 0 : i32
    return %c0_i32, %c0_i32_0 : i32, i32
  }
  func.func @transform_4(%arg0: i32) -> (i32, i32) {
    %c0_i32 = arith.constant 0 : i32
    %c0_i32_0 = arith.constant 0 : i32
    %c0_i32_1 = arith.constant 0 : i32
    return %c0_i32, %c0_i32_0 : i32, i32
  }
  func.func @transform_5(%arg0: i32) -> (i32, i32) {
    %c0_i32 = arith.constant 0 : i32
    %c0_i32_0 = arith.constant 0 : i32
    %c0_i32_1 = arith.constant 0 : i32
    return %c0_i32, %c0_i32_0 : i32, i32
  }
  func.func @transform_6(%arg0: i32) -> (i32, i32) {
    %c0_i32 = arith.constant 0 : i32
    %c0_i32_0 = arith.constant 0 : i32
    %c0_i32_1 = arith.constant 0 : i32
    return %c0_i32, %c0_i32_0 : i32, i32
  }
  func.func @transform_7(%arg0: i32) -> (i32, i32) {
    %c0_i32 = arith.constant 0 : i32
    %c0_i32_0 = arith.constant 0 : i32
    %c0_i32_1 = arith.constant 0 : i32
    return %c0_i32, %c0_i32_0 : i32, i32
  }
  func.func @transform_8(%arg0: i32) -> (i32, i32, i32) {
    %c0_i32 = arith.constant 0 : i32
    %c0_i32_0 = arith.constant 0 : i32
    %c0_i32_1 = arith.constant 0 : i32
    return %arg0, %c0_i32, %c0_i32_0 : i32, i32, i32
  }
}

</mosaic_0001>

<llo_original>
// kernel: distance_function_forward.1
$region0: #{distance_function_forward.1}
  #allocation0 [shape = 'u32[]', space=smem, size = 0x4, offset = 0x4, fixed_abs, tag = 'smem constant byte address 0x4 - core index']
  #allocation1 [shape = 'u32[144,128]{1,0:T(1,128)}', space=vmem, size = 0x12000, scoped, tag = 'internal scratch']
  %s0 = inlined_call_operand.vmem [shape: f32[32,12], index: 0, kind: input, shape index: {}]
  %s1 = inlined_call_operand.vmem [shape: f32[32,16], index: 1, kind: input, shape index: {}]
  %s2 = inlined_call_operand.vmem [shape: f32[16,64], index: 2, kind: input, shape index: {}]
  %s3 = inlined_call_operand.vmem [shape: f32[16,64], index: 3, kind: input, shape index: {}]
  %s4 = inlined_call_operand.vmem [shape: bf16[12,64], index: 4, kind: input, shape index: {}]
  %s5 = inlined_call_operand.vmem [shape: f32[1,64], index: 5, kind: input, shape index: {}]
  %s6 = inlined_call_operand.vmem [shape: bf16[64,64], index: 6, kind: input, shape index: {}]
  %s7 = inlined_call_operand.vmem [shape: bf16[16,64], index: 7, kind: input, shape index: {}]
  %s8 = inlined_call_operand.vmem [shape: f32[2,16,32], index: 8, kind: output, shape index: {}]
  %s9 = sld [smem:[#allocation0]]
  $region42: #{distance_function_forward.1} parent=0
    _
  %s11 = ssub.s32 1, %s9
  %s12 = scalar_select 0, %s11, %s9
  // Predicated region
  $region2: #{distance_function_forward.1} parent=0 // pred_check
    _
  $region3: #{distance_function_forward.1} parent=0 // pred_check_branch
    %14 = sbr.rel (0) target = $region5
  $region4: #{distance_function_forward.1} parent=0 // pred_region
    _
  $region5: #{distance_function_forward.1} parent=0 // pred_fallthru
    _
  // Predicated region
  $region6: #{distance_function_forward.1} parent=0 // pred_check
    _
  $region7: #{distance_function_forward.1} parent=0 // pred_check_branch
    %16 = sbr.rel (0) target = $region9
  $region8: #{distance_function_forward.1} parent=0 // pred_region
    _
  $region9: #{distance_function_forward.1} parent=0 // pred_fallthru
    _
  // Predicated region
  $region10: #{distance_function_forward.1} parent=0 // pred_check
    _
  $region11: #{distance_function_forward.1} parent=0 // pred_check_branch
    %18 = sbr.rel (0) target = $region13
  $region12: #{distance_function_forward.1} parent=0 // pred_region
    _
  $region13: #{distance_function_forward.1} parent=0 // pred_fallthru
    _
  // Predicated region
  $region14: #{distance_function_forward.1} parent=0 // pred_check
    _
  $region15: #{distance_function_forward.1} parent=0 // pred_check_branch
    %20 = sbr.rel (0) target = $region17
  $region16: #{distance_function_forward.1} parent=0 // pred_region
    _
  $region17: #{distance_function_forward.1} parent=0 // pred_fallthru
    _
  // Predicated region
  $region18: #{distance_function_forward.1} parent=0 // pred_check
    _
  $region19: #{distance_function_forward.1} parent=0 // pred_check_branch
    %22 = sbr.rel (0) target = $region21
  $region20: #{distance_function_forward.1} parent=0 // pred_region
    _
  $region21: #{distance_function_forward.1} parent=0 // pred_fallthru
    _
  // Predicated region
  $region22: #{distance_function_forward.1} parent=0 // pred_check
    _
  $region23: #{distance_function_forward.1} parent=0 // pred_check_branch
    %24 = sbr.rel (0) target = $region25
  $region24: #{distance_function_forward.1} parent=0 // pred_region
    _
  $region25: #{distance_function_forward.1} parent=0 // pred_fallthru
    _
  // Predicated region
  $region26: #{distance_function_forward.1} parent=0 // pred_check
    _
  $region27: #{distance_function_forward.1} parent=0 // pred_check_branch
    %26 = sbr.rel (0) target = $region29
  $region28: #{distance_function_forward.1} parent=0 // pred_region
    _
  $region29: #{distance_function_forward.1} parent=0 // pred_fallthru
    _
  // Predicated region
  $region30: #{distance_function_forward.1} parent=0 // pred_check
    _
  $region31: #{distance_function_forward.1} parent=0 // pred_check_branch
    %28 = sbr.rel (0) target = $region33
  $region32: #{distance_function_forward.1} parent=0 // pred_region
    _
  $region33: #{distance_function_forward.1} parent=0 // pred_fallthru
    _
  %v30 = vld [vmem:[%s0] sm:$0xff]
  %v31 = vld [vmem:[%s0 + $0x8] sm:$0xff]
  %v32 = vld [vmem:[%s0 + $0x10] sm:$0xff]
  %v33 = vld [vmem:[%s0 + $0x18] sm:$0xff]
  %v34 = vpack.c.bf16 %v31, %v30
  %v35 = vpack.c.bf16 %v33, %v32
  %v36 = vld [vmem:[%s4] sm:$0xf]
  %v37 = vld [vmem:[%s4 + $0x4] sm:$0x3]
  %v38 = vld [vmem:[%s5] sm:$0x1]
  %v40 = vlaneseq
  %v41 = vshrl.u32 %v40, 7
  %v42 = vsub.s32 0, %v41
  %v43 = vrot.slane %v38, %v42
  %v47 = vunpack.c.l.b16 %v36
  %v48 = vunpack.c.l.b16 %v37
  %v49 = vpack.c.b16 %v48, %v47
  %vm50 = vcmask 97280
  %v52 = vsel %vm50, %v34, 0
  %v55 = vsel %vm50, %v35, 0
  %vm57 = vcmask 1045504
  %v59 = vsel %vm57, %v49, 0
  %61 = vmatprep.subr.bf16.mxu0 0
  %62 = vmatpush1.bf16.msra.mxu0 0
  %63 = vmatprep.subr.bf16.mxu0 0
  %64 = vmatpush1.bf16.msra.mxu0 0
  %65 = vmatprep.subr.bf16.mxu0 0
  %66 = vmatpush1.bf16.msra.mxu0 0
  %67 = vmatprep.subr.bf16.mxu0 0
  %68 = vmatpush1.bf16.msra.mxu0 0
  %69 = vmatprep.subr.bf16.mxu0 0
  %70 = vmatpush1.bf16.msra.mxu0 0
  %71 = vmatprep.subr.bf16.mxu0 0
  %72 = vmatpush1.bf16.msra.mxu0 0
  %73 = vmatprep.subr.bf16.mxu0 0
  %74 = vmatpush1.bf16.msra.mxu0 0
  %75 = vmatprep.subr.bf16.mxu0 0
  %76 = vmatpush1.bf16.msra.mxu0 %v59
  %77 = vmatprep.subr.bf16.mxu0 0
  %78 = vmatpush2.bf16.msra.mxu0 0
  %79 = vmatprep.subr.bf16.mxu0 0
  %80 = vmatpush2.bf16.msra.mxu0 0
  %81 = vmatprep.subr.bf16.mxu0 0
  %82 = vmatpush2.bf16.msra.mxu0 0
  %83 = vmatprep.subr.bf16.mxu0 0
  %84 = vmatpush2.bf16.msra.mxu0 0
  %85 = vmatprep.subr.bf16.mxu0 0
  %86 = vmatpush2.bf16.msra.mxu0 0
  %87 = vmatprep.subr.bf16.mxu0 0
  %88 = vmatpush2.bf16.msra.mxu0 0
  %89 = vmatprep.subr.bf16.mxu0 0
  %90 = vmatpush2.bf16.msra.mxu0 0
  %91 = vmatprep.subr.bf16.mxu0 0
  %92 = vmatpush2.bf16.msra.mxu0 0
  %93 = vmatprep.mubr.bf16.mxu0 0
  %94 = vmatmul.mubr.bf16.gmra.mxu0 %v52
  %v95 = vpop.f32.mrf.mxu0
  %v96 = vadd.f32 %v43, %v95
  %v97 = vpop.f32.mrf.mxu0
  %v98 = vpop.f32.mrf.mxu0
  %v99 = vadd.f32 %v43, %v98
  %v100 = vpop.f32.mrf.mxu0
  %101 = vmatprep.mubr.bf16.mxu0 0
  %102 = vmatmul.mubr.bf16.gmra.mxu0 %v55
  %v103 = vpop.f32.mrf.mxu0
  %v104 = vadd.f32 %v43, %v103
  %v105 = vpop.f32.mrf.mxu0
  %v106 = vpop.f32.mrf.mxu0
  %v107 = vadd.f32 %v43, %v106
  %v108 = vpop.f32.mrf.mxu0
  %109 = vdwg.mxu0
  %v110 = vmax.f32 %v96, 0.0
  %v111 = vmax.f32 %v99, 0.0
  %v112 = vmax.f32 %v104, 0.0
  %v113 = vmax.f32 %v107, 0.0
  %v114 = vpack.c.bf16 %v111, %v110
  %v115 = vpack.c.bf16 %v113, %v112
  %v116 = vld [vmem:[%s6] sm:$0xf]
  %v117 = vld [vmem:[%s6 + $0x4] sm:$0xf]
  %v118 = vld [vmem:[%s6 + $0x8] sm:$0xf]
  %v119 = vld [vmem:[%s6 + $0xc] sm:$0xf]
  %v120 = vld [vmem:[%s6 + $0x10] sm:$0xf]
  %v121 = vld [vmem:[%s6 + $0x14] sm:$0xf]
  %v122 = vld [vmem:[%s6 + $0x18] sm:$0xf]
  %v123 = vld [vmem:[%s6 + $0x1c] sm:$0xf]
  %v124 = vld [vmem:[%s1] sm:$0xff]
  %v125 = vld [vmem:[%s1 + $0x8] sm:$0xff]
  %v126 = vld [vmem:[%s1 + $0x10] sm:$0xff]
  %v127 = vld [vmem:[%s1 + $0x18] sm:$0xff]
  %v128 = vpack.c.bf16 %v125, %v124
  %v129 = vpack.c.bf16 %v127, %v126
  %v130 = vld [vmem:[%s7] sm:$0xf]
  %v131 = vld [vmem:[%s7 + $0x4] sm:$0xf]
  %v134 = vunpack.c.l.b16 %v130
  %v135 = vunpack.c.l.b16 %v131
  %v136 = vpack.c.b16 %v135, %v134
  %vm138 = vcmask 130048
  %v140 = vsel %vm138, %v128, 0
  %v143 = vsel %vm138, %v129, 0
  %145 = vmatprep.subr.bf16.mxu0 0
  %146 = vmatpush1.bf16.msra.mxu0 0
  %147 = vmatprep.subr.bf16.mxu0 0
  %148 = vmatpush1.bf16.msra.mxu0 0
  %149 = vmatprep.subr.bf16.mxu0 0
  %150 = vmatpush1.bf16.msra.mxu0 0
  %151 = vmatprep.subr.bf16.mxu0 0
  %152 = vmatpush1.bf16.msra.mxu0 0
  %153 = vmatprep.subr.bf16.mxu0 0
  %154 = vmatpush1.bf16.msra.mxu0 0
  %155 = vmatprep.subr.bf16.mxu0 0
  %156 = vmatpush1.bf16.msra.mxu0 0
  %157 = vmatprep.subr.bf16.mxu0 0
  %158 = vmatpush1.bf16.msra.mxu0 0
  %159 = vmatprep.subr.bf16.mxu0 0
  %160 = vmatpush1.bf16.msra.mxu0 %v136
  %161 = vmatprep.subr.bf16.mxu0 0
  %162 = vmatpush2.bf16.msra.mxu0 0
  %163 = vmatprep.subr.bf16.mxu0 0
  %164 = vmatpush2.bf16.msra.mxu0 0
  %165 = vmatprep.subr.bf16.mxu0 0
  %166 = vmatpush2.bf16.msra.mxu0 0
  %167 = vmatprep.subr.bf16.mxu0 0
  %168 = vmatpush2.bf16.msra.mxu0 0
  %169 = vmatprep.subr.bf16.mxu0 0
  %170 = vmatpush2.bf16.msra.mxu0 0
  %171 = vmatprep.subr.bf16.mxu0 0
  %172 = vmatpush2.bf16.msra.mxu0 0
  %173 = vmatprep.subr.bf16.mxu0 0
  %174 = vmatpush2.bf16.msra.mxu0 0
  %175 = vmatprep.subr.bf16.mxu0 0
  %176 = vmatpush2.bf16.msra.mxu0 0
  %177 = vmatprep.mubr.bf16.mxu0 0
  %178 = vmatmul.mubr.bf16.gmra.mxu0 %v140
  %v179 = vpop.f32.mrf.mxu0
  %v180 = vadd.f32 0.0, %v179
  %v181 = vpop.f32.mrf.mxu0
  %v182 = vpop.f32.mrf.mxu0
  %v183 = vadd.f32 0.0, %v182
  %v184 = vpop.f32.mrf.mxu0
  %185 = vmatprep.mubr.bf16.mxu0 0
  %186 = vmatmul.mubr.bf16.gmra.mxu0 %v143
  %v187 = vpop.f32.mrf.mxu0
  %v188 = vadd.f32 0.0, %v187
  %v189 = vpop.f32.mrf.mxu0
  %v190 = vpop.f32.mrf.mxu0
  %v191 = vadd.f32 0.0, %v190
  %v192 = vpop.f32.mrf.mxu0
  %193 = vdwg.mxu0
  %v202 = vunpack.c.l.b16 %v116
  %v203 = vunpack.c.l.b16 %v117
  %v204 = vunpack.c.l.b16 %v118
  %v205 = vunpack.c.l.b16 %v119
  %v206 = vunpack.c.l.b16 %v120
  %v207 = vunpack.c.l.b16 %v121
  %v208 = vunpack.c.l.b16 %v122
  %v209 = vunpack.c.l.b16 %v123
  %v210 = vpack.c.b16 %v203, %v202
  %v211 = vpack.c.b16 %v205, %v204
  %v212 = vpack.c.b16 %v207, %v206
  %v213 = vpack.c.b16 %v209, %v208
  %vm218 = vcmask 523264
  %v220 = vsel %vm218, %v114, 0
  %v223 = vsel %vm218, %v115, 0
  %225 = vmatprep.subr.bf16.mxu0 0
  %226 = vmatpush1.bf16.msra.mxu0 0
  %227 = vmatprep.subr.bf16.mxu0 0
  %228 = vmatpush1.bf16.msra.mxu0 0
  %229 = vmatprep.subr.bf16.mxu0 0
  %230 = vmatpush1.bf16.msra.mxu0 0
  %231 = vmatprep.subr.bf16.mxu0 0
  %232 = vmatpush1.bf16.msra.mxu0 0
  %233 = vmatprep.subr.bf16.mxu0 0
  %234 = vmatpush1.bf16.msra.mxu0 %v213
  %235 = vmatprep.subr.bf16.mxu0 0
  %236 = vmatpush1.bf16.msra.mxu0 %v212
  %237 = vmatprep.subr.bf16.mxu0 0
  %238 = vmatpush1.bf16.msra.mxu0 %v211
  %239 = vmatprep.subr.bf16.mxu0 0
  %240 = vmatpush1.bf16.msra.mxu0 %v210
  %241 = vmatprep.subr.bf16.mxu0 0
  %242 = vmatpush2.bf16.msra.mxu0 0
  %243 = vmatprep.subr.bf16.mxu0 0
  %244 = vmatpush2.bf16.msra.mxu0 0
  %245 = vmatprep.subr.bf16.mxu0 0
  %246 = vmatpush2.bf16.msra.mxu0 0
  %247 = vmatprep.subr.bf16.mxu0 0
  %248 = vmatpush2.bf16.msra.mxu0 0
  %249 = vmatprep.subr.bf16.mxu0 0
  %250 = vmatpush2.bf16.msra.mxu0 0
  %251 = vmatprep.subr.bf16.mxu0 0
  %252 = vmatpush2.bf16.msra.mxu0 0
  %253 = vmatprep.subr.bf16.mxu0 0
  %254 = vmatpush2.bf16.msra.mxu0 0
  %255 = vmatprep.subr.bf16.mxu0 0
  %256 = vmatpush2.bf16.msra.mxu0 0
  %257 = vmatprep.mubr.bf16.mxu0 0
  %258 = vmatmul.mubr.bf16.gmra.mxu0 %v220
  %v259 = vpop.f32.mrf.mxu0
  %v260 = vadd.f32 %v180, %v259
  %v261 = vpop.f32.mrf.mxu0
  %v262 = vpop.f32.mrf.mxu0
  %v263 = vadd.f32 %v183, %v262
  %v264 = vpop.f32.mrf.mxu0
  %265 = vmatprep.mubr.bf16.mxu0 0
  %266 = vmatmul.mubr.bf16.gmra.mxu0 %v223
  %v267 = vpop.f32.mrf.mxu0
  %v268 = vadd.f32 %v188, %v267
  %v269 = vpop.f32.mrf.mxu0
  %v270 = vpop.f32.mrf.mxu0
  %v271 = vadd.f32 %v191, %v270
  %v272 = vpop.f32.mrf.mxu0
  %273 = vdwg.mxu0
  %v274 = vld [vmem:[%s2] sm:$0xff]
  %v275 = vld [vmem:[%s2 + $0x8] sm:$0xff]
  %v276 = vld [vmem:[%s3] sm:$0xff]
  %v277 = vld [vmem:[%s3 + $0x8] sm:$0xff]
  %v278 = vadd.f32 %v260, %v274
  %v279 = vadd.f32 %v263, %v275
  %v280 = vpack.c.bf16 %v279, %v278
  %282 = vrot.lane.b32.xlu0 %v280, 96
  %v283 = vpop.permute.xlu0 %282
  %vm284 = vcmask 261120
  %v286 = vsel %vm284, %v280, 0
  %v289 = vsel %vm284, %v283, 0
  %291 = vmatprep.subr.bf16.mxu0 0
  %292 = vmatpush1.bf16.xpose.msra.mxu0 0
  %293 = vmatprep.subr.bf16.mxu0 0
  %294 = vmatpush1.bf16.xpose.msra.mxu0 0
  %295 = vmatprep.subr.bf16.mxu0 0
  %296 = vmatpush1.bf16.xpose.msra.mxu0 0
  %297 = vmatprep.subr.bf16.mxu0 0
  %298 = vmatpush1.bf16.xpose.msra.mxu0 0
  %299 = vmatprep.subr.bf16.mxu0 0
  %300 = vmatpush1.bf16.xpose.msra.mxu0 0
  %301 = vmatprep.subr.bf16.mxu0 0
  %302 = vmatpush1.bf16.xpose.msra.mxu0 0
  %303 = vmatprep.subr.bf16.mxu0 0
  %304 = vmatpush1.bf16.xpose.msra.mxu0 0
  %305 = vmatprep.subr.bf16.mxu0 0
  %306 = vmatpush1.bf16.xpose.msra.mxu0 %v289
  %307 = vmatprep.subr.bf16.mxu0 0
  %308 = vmatpush2.bf16.xpose.msra.mxu0 0
  %309 = vmatprep.subr.bf16.mxu0 0
  %310 = vmatpush2.bf16.xpose.msra.mxu0 0
  %311 = vmatprep.subr.bf16.mxu0 0
  %312 = vmatpush2.bf16.xpose.msra.mxu0 0
  %313 = vmatprep.subr.bf16.mxu0 0
  %314 = vmatpush2.bf16.xpose.msra.mxu0 0
  %315 = vmatprep.subr.bf16.mxu0 0
  %316 = vmatpush2.bf16.xpose.msra.mxu0 0
  %317 = vmatprep.subr.bf16.mxu0 0
  %318 = vmatpush2.bf16.xpose.msra.mxu0 0
  %319 = vmatprep.subr.bf16.mxu0 0
  %320 = vmatpush2.bf16.xpose.msra.mxu0 0
  %321 = vmatprep.subr.bf16.mxu0 0
  %322 = vmatpush2.bf16.xpose.msra.mxu0 0
  %323 = vmatprep.mubr.bf16.mxu0 0
  %324 = vmatmul.mubr.bf16.gmra.mxu0 %v286
  %v325 = vpop.f32.mrf.mxu0
  %v326 = vadd.f32 0.0, %v325
  %v327 = vpop.f32.mrf.mxu0
  %v328 = vpop.f32.mrf.mxu0
  %v329 = vadd.f32 0.0, %v328
  %v330 = vpop.f32.mrf.mxu0
  %331 = vdwg.mxu0
  %v332 = vsel %vm138, %v326, -inf
  %333 = vmax.xlane.f32.xlu0 %v332
  %v334 = vpop.xlane.xlu0 %333
  %v335 = vsel %vm138, %v329, -inf
  %336 = vmax.xlane.f32.xlu0 %v335
  %v337 = vpop.xlane.xlu0 %336
  %v338 = vsub.f32 %v326, %v334
  %v339 = vsub.f32 %v329, %v337
  %v340 = vmul.f32 %v338, 1.442695
  %v341 = vpow.pop %v340
  %v342 = vmul.f32 %v339, 1.442695
  %v343 = vpow.pop %v342
  %v344 = vsel %vm138, %v341, 0.0
  %345 = vadd.xlane.f32.xlu0 %v344
  %v346 = vpop.xlane.xlu0 %345
  %v347 = vsel %vm138, %v343, 0.0
  %348 = vadd.xlane.f32.xlu0 %v347
  %v349 = vpop.xlane.xlu0 %348
  %v350 = vrcp.pop %v346
  %v351 = vmul.f32 %v341, %v350
  %v352 = vrcp.pop %v349
  %v353 = vmul.f32 %v343, %v352
  %v354 = vadd.f32 %v260, %v276
  %v355 = vadd.f32 %v263, %v277
  %v356 = vpack.c.bf16 %v355, %v354
  %358 = vrot.lane.b32.xlu0 %v356, 96
  %v359 = vpop.permute.xlu0 %358
  %v361 = vsel %vm284, %v356, 0
  %v364 = vsel %vm284, %v359, 0
  %366 = vmatprep.subr.bf16.mxu0 0
  %367 = vmatpush1.bf16.xpose.msra.mxu0 0
  %368 = vmatprep.subr.bf16.mxu0 0
  %369 = vmatpush1.bf16.xpose.msra.mxu0 0
  %370 = vmatprep.subr.bf16.mxu0 0
  %371 = vmatpush1.bf16.xpose.msra.mxu0 0
  %372 = vmatprep.subr.bf16.mxu0 0
  %373 = vmatpush1.bf16.xpose.msra.mxu0 0
  %374 = vmatprep.subr.bf16.mxu0 0
  %375 = vmatpush1.bf16.xpose.msra.mxu0 0
  %376 = vmatprep.subr.bf16.mxu0 0
  %377 = vmatpush1.bf16.xpose.msra.mxu0 0
  %378 = vmatprep.subr.bf16.mxu0 0
  %379 = vmatpush1.bf16.xpose.msra.mxu0 0
  %380 = vmatprep.subr.bf16.mxu0 0
  %381 = vmatpush1.bf16.xpose.msra.mxu0 %v364
  %382 = vmatprep.subr.bf16.mxu0 0
  %383 = vmatpush2.bf16.xpose.msra.mxu0 0
  %384 = vmatprep.subr.bf16.mxu0 0
  %385 = vmatpush2.bf16.xpose.msra.mxu0 0
  %386 = vmatprep.subr.bf16.mxu0 0
  %387 = vmatpush2.bf16.xpose.msra.mxu0 0
  %388 = vmatprep.subr.bf16.mxu0 0
  %389 = vmatpush2.bf16.xpose.msra.mxu0 0
  %390 = vmatprep.subr.bf16.mxu0 0
  %391 = vmatpush2.bf16.xpose.msra.mxu0 0
  %392 = vmatprep.subr.bf16.mxu0 0
  %393 = vmatpush2.bf16.xpose.msra.mxu0 0
  %394 = vmatprep.subr.bf16.mxu0 0
  %395 = vmatpush2.bf16.xpose.msra.mxu0 0
  %396 = vmatprep.subr.bf16.mxu0 0
  %397 = vmatpush2.bf16.xpose.msra.mxu0 0
  %398 = vmatprep.mubr.bf16.mxu0 0
  %399 = vmatmul.mubr.bf16.gmra.mxu0 %v361
  %v400 = vpop.f32.mrf.mxu0
  %v401 = vadd.f32 0.0, %v400
  %v402 = vpop.f32.mrf.mxu0
  %v403 = vpop.f32.mrf.mxu0
  %v404 = vadd.f32 0.0, %v403
  %v405 = vpop.f32.mrf.mxu0
  %406 = vdwg.mxu0
  %v407 = vsel %vm138, %v401, -inf
  %408 = vmax.xlane.f32.xlu0 %v407
  %v409 = vpop.xlane.xlu0 %408
  %v410 = vsel %vm138, %v404, -inf
  %411 = vmax.xlane.f32.xlu0 %v410
  %v412 = vpop.xlane.xlu0 %411
  %v413 = vsub.f32 %v401, %v409
  %v414 = vsub.f32 %v404, %v412
  %v415 = vmul.f32 %v413, 1.442695
  %v416 = vpow.pop %v415
  %v417 = vmul.f32 %v414, 1.442695
  %v418 = vpow.pop %v417
  %v419 = vsel %vm138, %v416, 0.0
  %420 = vadd.xlane.f32.xlu0 %v419
  %v421 = vpop.xlane.xlu0 %420
  %v422 = vsel %vm138, %v418, 0.0
  %423 = vadd.xlane.f32.xlu0 %v422
  %v424 = vpop.xlane.xlu0 %423
  %v425 = vrcp.pop %v421
  %v426 = vmul.f32 %v416, %v425
  %v427 = vrcp.pop %v424
  %v428 = vmul.f32 %v418, %v427
  %431 = vrot.lane.b32.xlu0 %v426, 16
  %v432 = vpop.permute.xlu0 %431
  %433 = vrot.lane.b32.xlu0 %v428, 16
  %v434 = vpop.permute.xlu0 %433
  %v437 = vsel %vm138, %v351, %v432
  %v438 = vsel %vm138, %v353, %v434
  %439 = vst.msk [vmem:[%s8] sm:$0xff] %vm284, %v437
  %440 = vst.msk [vmem:[%s8 + $0x8] sm:$0xff] %vm284, %v438
  %v441 = vadd.f32 %v268, %v274
  %v442 = vadd.f32 %v271, %v275
  %v443 = vpack.c.bf16 %v442, %v441
  %445 = vrot.lane.b32.xlu0 %v443, 96
  %v446 = vpop.permute.xlu0 %445
  %v448 = vsel %vm284, %v443, 0
  %v451 = vsel %vm284, %v446, 0
  %453 = vmatprep.subr.bf16.mxu0 0
  %454 = vmatpush1.bf16.xpose.msra.mxu0 0
  %455 = vmatprep.subr.bf16.mxu0 0
  %456 = vmatpush1.bf16.xpose.msra.mxu0 0
  %457 = vmatprep.subr.bf16.mxu0 0
  %458 = vmatpush1.bf16.xpose.msra.mxu0 0
  %459 = vmatprep.subr.bf16.mxu0 0
  %460 = vmatpush1.bf16.xpose.msra.mxu0 0
  %461 = vmatprep.subr.bf16.mxu0 0
  %462 = vmatpush1.bf16.xpose.msra.mxu0 0
  %463 = vmatprep.subr.bf16.mxu0 0
  %464 = vmatpush1.bf16.xpose.msra.mxu0 0
  %465 = vmatprep.subr.bf16.mxu0 0
  %466 = vmatpush1.bf16.xpose.msra.mxu0 0
  %467 = vmatprep.subr.bf16.mxu0 0
  %468 = vmatpush1.bf16.xpose.msra.mxu0 %v451
  %469 = vmatprep.subr.bf16.mxu0 0
  %470 = vmatpush2.bf16.xpose.msra.mxu0 0
  %471 = vmatprep.subr.bf16.mxu0 0
  %472 = vmatpush2.bf16.xpose.msra.mxu0 0
  %473 = vmatprep.subr.bf16.mxu0 0
  %474 = vmatpush2.bf16.xpose.msra.mxu0 0
  %475 = vmatprep.subr.bf16.mxu0 0
  %476 = vmatpush2.bf16.xpose.msra.mxu0 0
  %477 = vmatprep.subr.bf16.mxu0 0
  %478 = vmatpush2.bf16.xpose.msra.mxu0 0
  %479 = vmatprep.subr.bf16.mxu0 0
  %480 = vmatpush2.bf16.xpose.msra.mxu0 0
  %481 = vmatprep.subr.bf16.mxu0 0
  %482 = vmatpush2.bf16.xpose.msra.mxu0 0
  %483 = vmatprep.subr.bf16.mxu0 0
  %484 = vmatpush2.bf16.xpose.msra.mxu0 0
  %485 = vmatprep.mubr.bf16.mxu0 0
  %486 = vmatmul.mubr.bf16.gmra.mxu0 %v448
  %v487 = vpop.f32.mrf.mxu0
  %v488 = vadd.f32 0.0, %v487
  %v489 = vpop.f32.mrf.mxu0
  %v490 = vpop.f32.mrf.mxu0
  %v491 = vadd.f32 0.0, %v490
  %v492 = vpop.f32.mrf.mxu0
  %493 = vdwg.mxu0
  %v494 = vsel %vm138, %v488, -inf
  %495 = vmax.xlane.f32.xlu0 %v494
  %v496 = vpop.xlane.xlu0 %495
  %v497 = vsel %vm138, %v491, -inf
  %498 = vmax.xlane.f32.xlu0 %v497
  %v499 = vpop.xlane.xlu0 %498
  %v500 = vsub.f32 %v488, %v496
  %v501 = vsub.f32 %v491, %v499
  %v502 = vmul.f32 %v500, 1.442695
  %v503 = vpow.pop %v502
  %v504 = vmul.f32 %v501, 1.442695
  %v505 = vpow.pop %v504
  %v506 = vsel %vm138, %v503, 0.0
  %507 = vadd.xlane.f32.xlu0 %v506
  %v508 = vpop.xlane.xlu0 %507
  %v509 = vsel %vm138, %v505, 0.0
  %510 = vadd.xlane.f32.xlu0 %v509
  %v511 = vpop.xlane.xlu0 %510
  %v512 = vrcp.pop %v508
  %v513 = vmul.f32 %v503, %v512
  %v514 = vrcp.pop %v511
  %v515 = vmul.f32 %v505, %v514
  %v516 = vadd.f32 %v268, %v276
  %v517 = vadd.f32 %v271, %v277
  %v518 = vpack.c.bf16 %v517, %v516
  %520 = vrot.lane.b32.xlu0 %v518, 96
  %v521 = vpop.permute.xlu0 %520
  %v523 = vsel %vm284, %v518, 0
  %v526 = vsel %vm284, %v521, 0
  %528 = vmatprep.subr.bf16.mxu0 0
  %529 = vmatpush1.bf16.xpose.msra.mxu0 0
  %530 = vmatprep.subr.bf16.mxu0 0
  %531 = vmatpush1.bf16.xpose.msra.mxu0 0
  %532 = vmatprep.subr.bf16.mxu0 0
  %533 = vmatpush1.bf16.xpose.msra.mxu0 0
  %534 = vmatprep.subr.bf16.mxu0 0
  %535 = vmatpush1.bf16.xpose.msra.mxu0 0
  %536 = vmatprep.subr.bf16.mxu0 0
  %537 = vmatpush1.bf16.xpose.msra.mxu0 0
  %538 = vmatprep.subr.bf16.mxu0 0
  %539 = vmatpush1.bf16.xpose.msra.mxu0 0
  %540 = vmatprep.subr.bf16.mxu0 0
  %541 = vmatpush1.bf16.xpose.msra.mxu0 0
  %542 = vmatprep.subr.bf16.mxu0 0
  %543 = vmatpush1.bf16.xpose.msra.mxu0 %v526
  %544 = vmatprep.subr.bf16.mxu0 0
  %545 = vmatpush2.bf16.xpose.msra.mxu0 0
  %546 = vmatprep.subr.bf16.mxu0 0
  %547 = vmatpush2.bf16.xpose.msra.mxu0 0
  %548 = vmatprep.subr.bf16.mxu0 0
  %549 = vmatpush2.bf16.xpose.msra.mxu0 0
  %550 = vmatprep.subr.bf16.mxu0 0
  %551 = vmatpush2.bf16.xpose.msra.mxu0 0
  %552 = vmatprep.subr.bf16.mxu0 0
  %553 = vmatpush2.bf16.xpose.msra.mxu0 0
  %554 = vmatprep.subr.bf16.mxu0 0
  %555 = vmatpush2.bf16.xpose.msra.mxu0 0
  %556 = vmatprep.subr.bf16.mxu0 0
  %557 = vmatpush2.bf16.xpose.msra.mxu0 0
  %558 = vmatprep.subr.bf16.mxu0 0
  %559 = vmatpush2.bf16.xpose.msra.mxu0 0
  %560 = vmatprep.mubr.bf16.mxu0 0
  %561 = vmatmul.mubr.bf16.gmra.mxu0 %v523
  %v562 = vpop.f32.mrf.mxu0
  %v563 = vadd.f32 0.0, %v562
  %v564 = vpop.f32.mrf.mxu0
  %v565 = vpop.f32.mrf.mxu0
  %v566 = vadd.f32 0.0, %v565
  %v567 = vpop.f32.mrf.mxu0
  %568 = vdwg.mxu0
  %v569 = vsel %vm138, %v563, -inf
  %570 = vmax.xlane.f32.xlu0 %v569
  %v571 = vpop.xlane.xlu0 %570
  %v572 = vsel %vm138, %v566, -inf
  %573 = vmax.xlane.f32.xlu0 %v572
  %v574 = vpop.xlane.xlu0 %573
  %v575 = vsub.f32 %v563, %v571
  %v576 = vsub.f32 %v566, %v574
  %v577 = vmul.f32 %v575, 1.442695
  %v578 = vpow.pop %v577
  %v579 = vmul.f32 %v576, 1.442695
  %v580 = vpow.pop %v579
  %v581 = vsel %vm138, %v578, 0.0
  %582 = vadd.xlane.f32.xlu0 %v581
  %v583 = vpop.xlane.xlu0 %582
  %v584 = vsel %vm138, %v580, 0.0
  %585 = vadd.xlane.f32.xlu0 %v584
  %v586 = vpop.xlane.xlu0 %585
  %v587 = vrcp.pop %v583
  %v588 = vmul.f32 %v578, %v587
  %v589 = vrcp.pop %v586
  %v590 = vmul.f32 %v580, %v589
  %593 = vrot.lane.b32.xlu0 %v588, 16
  %v594 = vpop.permute.xlu0 %593
  %595 = vrot.lane.b32.xlu0 %v590, 16
  %v596 = vpop.permute.xlu0 %595
  %v599 = vsel %vm138, %v513, %v594
  %v600 = vsel %vm138, %v515, %v596
  %s601 = scalar_lea.vmem %s8, 16
  %602 = vst.msk [vmem:[%s601] sm:$0xff] %vm284, %v599
  %603 = vst.msk [vmem:[%s601 + $0x8] sm:$0xff] %vm284, %v600
  // Predicated region
  $region34: #{distance_function_forward.1} parent=0 // pred_check
    _
  $region35: #{distance_function_forward.1} parent=0 // pred_check_branch
    %605 = sbr.rel (0) target = $region37
  $region36: #{distance_function_forward.1} parent=0 // pred_region
    _
  $region37: #{distance_function_forward.1} parent=0 // pred_fallthru
    _
  // Predicated region
  $region38: #{distance_function_forward.1} parent=0 // pred_check
    _
  $region39: #{distance_function_forward.1} parent=0 // pred_check_branch
    %607 = sbr.rel (0) target = $region41
  $region40: #{distance_function_forward.1} parent=0 // pred_region
    _
  $region41: #{distance_function_forward.1} parent=0 // pred_fallthru
    _

</llo_original>
